<compile_context>
chip_gen: v7x
topology: tpu7x:2x2x1
jax: 0.10.0
libtpu: 0.0.40
codegen_flags: <defaults>
</compile_context>

<pallas_src>
import jax
import jax.numpy as jnp
from jax import lax
from jax.experimental import pallas as pl
from jax.experimental.pallas import tpu as pltpu

_SLAB = 128                          # lane width / slab size for in-kernel transpose
_TILE_CANDIDATES = (1024, 512, 256, 128)
_SMALL_BYTES = 1 << 20               # below this, XLA's (fusable) transpose wins
_VMEM_BUDGET = 16 * 1024 * 1024      # in + out tiles, each double-buffered


def _transpose_tile_kernel(x_ref, o_ref):
    """x_ref: (tm, tn) -> o_ref: (tn, tm). tm, tn are multiples of 128.

    Transpose slab-by-slab (128 columns of x at a time) so each load->xpose->
    store chain is short; the loop is a static, fully-unrolled Python loop
    (equivalent to lax.fori_loop(..., unroll=True) but with constant, 128-
    aligned offsets — no dynamic lane-dim addressing needed).
    """
    tn = o_ref.shape[0]
    n_slabs = tn // _SLAB
    if n_slabs <= 1:
        o_ref[...] = x_ref[...].T
        return
    for c in range(n_slabs):
        start = c * _SLAB            # static, 128-aligned
        o_ref[start:start + _SLAB, :] = x_ref[:, start:start + _SLAB].T


def _pick_tile(dim):
    """Largest 128-multiple tile for `dim`.

    Prefer one that evenly divides (no masked edge tiles); otherwise the
    largest candidate that fits (pl.cdiv grid, only the edge tile is masked).
    Returns None for lane-sparse dims (< 128) — caller bails to XLA.
    """
    for t in _TILE_CANDIDATES:
        if dim % t == 0:
            return t
    for t in _TILE_CANDIDATES:
        if t <= dim:
            return t
    return None


def _transpose_last2_pallas(xb):
    """(B, M, N) -> (B, N, M) via a tiled Pallas transpose of the last two dims."""
    B, M, N = xb.shape
    itemsize = xb.dtype.itemsize
    tm = _pick_tile(M)
    tn = _pick_tile(N)

    # VMEM budget: input + output tile, each double-buffered by the pipeline.
    while 4 * tm * tn * itemsize > _VMEM_BUDGET and (tm > _SLAB or tn > _SLAB):
        if tm >= tn and tm > _SLAB:
            tm //= 2
        else:
            tn //= 2

    grid = (pl.cdiv(M, tm), pl.cdiv(N, tn), B)

    return pl.pallas_call(
        _transpose_tile_kernel,
        out_shape=jax.ShapeDtypeStruct((B, N, M), xb.dtype),
        grid_spec=pltpu.PrefetchScalarGridSpec(
            num_scalar_prefetch=0,
            grid=grid,
            in_specs=[
                # Batch dim squeezed (None); kernel sees a 2-D (tm, tn) tile.
                pl.BlockSpec((None, tm, tn), lambda i, j, b: (b, i, j)),
            ],
            out_specs=pl.BlockSpec((None, tn, tm), lambda i, j, b: (b, j, i)),
        ),
        compiler_params=pltpu.CompilerParams(
            # Independent tiles -> every axis parallel; leading (largest) axis
            # first so v7x's two TensorCores both get work.
            dimension_semantics=("parallel", "parallel", "parallel"),
            vmem_limit_bytes=32 * 1024 * 1024,
        ),
        cost_estimate=pl.CostEstimate(
            flops=0,
            transcendentals=0,
            bytes_accessed=2 * xb.size * itemsize,  # one read + one write
        ),
    )(xb)


def pallas_transpose(x, dim0, dim1):
    """Equivalent of torch.transpose(x, dim0, dim1)."""
    nd = x.ndim
    d0, d1 = sorted((dim0 % nd, dim1 % nd))
    if d0 == d1:
        return x

    if (d0, d1) != (nd - 2, nd - 1):
        # TODO(synk): non-trailing dim pairs are not lowered to a Pallas kernel;
        # fall back to XLA's transpose for those cases.
        return jnp.swapaxes(x, d0, d1)

    M, N = x.shape[-2], x.shape[-1]
    nbytes = x.size * x.dtype.itemsize
    if nbytes < _SMALL_BYTES or _pick_tile(M) is None or _pick_tile(N) is None:
        # Tiny tensor (per-step pallas_call overhead dominates and XLA can fuse
        # the transpose into neighbouring ops) or lane-sparse dims (< 128,
        # which would force masked stores): let XLA handle it.
        return jnp.swapaxes(x, d0, d1)

    lead = x.shape[:-2]
    y3 = _transpose_last2_pallas(x.reshape((-1, M, N)))
    return y3.reshape(lead + (N, M))


class Transpose:
    """JAX/Pallas equivalent of the PyTorch Transpose wrapper module."""

    def __init__(self, shape: tuple):
        self.shape = shape

    def __call__(self, inputs):
        return pallas_transpose(inputs, *self.shape)


if __name__ == "__main__":
    key = jax.random.PRNGKey(0)
    k1, k2, k3 = jax.random.split(key, 3)

    # 1) Conformer ConvModule usage: Transpose(shape=(1, 2)) on small (B, T, D).
    #    2 KiB tensor -> small-tensor bail-out path (pure XLA swapaxes).
    B, T, D = 2, 8, 32
    x = jax.random.normal(k1, (B, T, D), dtype=jnp.float32)
    mod = Transpose(shape=(1, 2))
    y = jax.block_until_ready(mod(x))
    assert y.shape == (B, D, T)
    assert jnp.array_equal(y, jnp.swapaxes(x, 1, 2))

    # 2) Lane-aligned, > 1 MiB: Pallas tiled path; tm=128 (M=384), tn=512
    #    (N=512) -> 4 column slabs per tile, lane-dense unmasked stores.
    x2 = jax.random.normal(k2, (2, 384, 512), dtype=jnp.float32)
    y2 = jax.block_until_ready(Transpose(shape=(1, 2))(x2))
    assert y2.shape == (2, 512, 384)
    assert jnp.array_equal(y2, jnp.swapaxes(x2, 1, 2))

    # 3) Non-128-divisible M (= 320): pl.cdiv grid, only the edge tile along the
    #    M-block axis is masked; inner tiles stay lane-dense.
    x3 = jax.random.normal(k3, (2, 320, 512), dtype=jnp.float32)
    y3 = jax.block_until_ready(Transpose(shape=(1, 2))(x3))
    assert y3.shape == (2, 512, 320)
    assert jnp.array_equal(y3, jnp.swapaxes(x3, 1, 2))

    print("KERNEL_OK")
</pallas_src>

<mosaic_0001>
module attributes {stable_mosaic.version = 11 : i64} {
  func.func @_transpose_tile_kernel(%arg0: i32, %arg1: i32, %arg2: i32, %arg3: memref<1x128x512xf32, #tpu.memory_space<vmem>>, %arg4: memref<1x512x128xf32, #tpu.memory_space<vmem>>) attributes {dimension_semantics = [#tpu.dimension_semantics<parallel>, #tpu.dimension_semantics<parallel>, #tpu.dimension_semantics<parallel>], iteration_bounds = array<i64: 3, 1, 2>, scalar_prefetch = 0 : i64, scratch_operands = 0 : i64, tpu.core_type = #tpu.core_type<tc>, window_params = [{transform_indices = @transform_0, window_bounds = array<i64: 1, 128, 512>}, {transform_indices = @transform_1, window_bounds = array<i64: 1, 512, 128>}]} {
    %c0 = arith.constant 0 : index
    %c0_0 = arith.constant 0 : index
    %c0_1 = arith.constant 0 : index
    %0 = vector.load %arg3[%c0, %c0_0, %c0_1] : memref<1x128x512xf32, #tpu.memory_space<vmem>>, vector<1x128x128xf32>
    %1 = vector.shape_cast %0 : vector<1x128x128xf32> to vector<128x128xf32>
    %2 = tpu.transpose %1, [1, 0] : vector<128x128xf32> -> vector<128x128xf32>
    %c0_2 = arith.constant 0 : index
    %c0_3 = arith.constant 0 : index
    %c0_4 = arith.constant 0 : index
    %3 = vector.load %arg4[%c0_2, %c0_3, %c0_4] : memref<1x512x128xf32, #tpu.memory_space<vmem>>, vector<1x128x128xf32>
    %4 = vector.shape_cast %3 : vector<1x128x128xf32> to vector<128x128xf32>
    %5 = vector.shape_cast %2 : vector<128x128xf32> to vector<1x128x128xf32>
    tpu.vector_store %arg4[%c0_2, %c0_3, %c0_4], %5 {strides = array<i32>} : memref<1x512x128xf32, #tpu.memory_space<vmem>>, vector<1x128x128xf32>,
    %c0_5 = arith.constant 0 : index
    %c0_6 = arith.constant 0 : index
    %c128 = arith.constant 128 : index
    %6 = vector.load %arg3[%c0_5, %c0_6, %c128] : memref<1x128x512xf32, #tpu.memory_space<vmem>>, vector<1x128x128xf32>
    %7 = vector.shape_cast %6 : vector<1x128x128xf32> to vector<128x128xf32>
    %8 = tpu.transpose %7, [1, 0] : vector<128x128xf32> -> vector<128x128xf32>
    %c0_7 = arith.constant 0 : index
    %c128_8 = arith.constant 128 : index
    %c0_9 = arith.constant 0 : index
    %9 = vector.load %arg4[%c0_7, %c128_8, %c0_9] : memref<1x512x128xf32, #tpu.memory_space<vmem>>, vector<1x128x128xf32>
    %10 = vector.shape_cast %9 : vector<1x128x128xf32> to vector<128x128xf32>
    %11 = vector.shape_cast %8 : vector<128x128xf32> to vector<1x128x128xf32>
    tpu.vector_store %arg4[%c0_7, %c128_8, %c0_9], %11 {strides = array<i32>} : memref<1x512x128xf32, #tpu.memory_space<vmem>>, vector<1x128x128xf32>,
    %c0_10 = arith.constant 0 : index
    %c0_11 = arith.constant 0 : index
    %c256 = arith.constant 256 : index
    %12 = vector.load %arg3[%c0_10, %c0_11, %c256] : memref<1x128x512xf32, #tpu.memory_space<vmem>>, vector<1x128x128xf32>
    %13 = vector.shape_cast %12 : vector<1x128x128xf32> to vector<128x128xf32>
    %14 = tpu.transpose %13, [1, 0] : vector<128x128xf32> -> vector<128x128xf32>
    %c0_12 = arith.constant 0 : index
    %c256_13 = arith.constant 256 : index
    %c0_14 = arith.constant 0 : index
    %15 = vector.load %arg4[%c0_12, %c256_13, %c0_14] : memref<1x512x128xf32, #tpu.memory_space<vmem>>, vector<1x128x128xf32>
    %16 = vector.shape_cast %15 : vector<1x128x128xf32> to vector<128x128xf32>
    %17 = vector.shape_cast %14 : vector<128x128xf32> to vector<1x128x128xf32>
    tpu.vector_store %arg4[%c0_12, %c256_13, %c0_14], %17 {strides = array<i32>} : memref<1x512x128xf32, #tpu.memory_space<vmem>>, vector<1x128x128xf32>,
    %c0_15 = arith.constant 0 : index
    %c0_16 = arith.constant 0 : index
    %c384 = arith.constant 384 : index
    %18 = vector.load %arg3[%c0_15, %c0_16, %c384] : memref<1x128x512xf32, #tpu.memory_space<vmem>>, vector<1x128x128xf32>
    %19 = vector.shape_cast %18 : vector<1x128x128xf32> to vector<128x128xf32>
    %20 = tpu.transpose %19, [1, 0] : vector<128x128xf32> -> vector<128x128xf32>
    %c0_17 = arith.constant 0 : index
    %c384_18 = arith.constant 384 : index
    %c0_19 = arith.constant 0 : index
    %21 = vector.load %arg4[%c0_17, %c384_18, %c0_19] : memref<1x512x128xf32, #tpu.memory_space<vmem>>, vector<1x128x128xf32>
    %22 = vector.shape_cast %21 : vector<1x128x128xf32> to vector<128x128xf32>
    %23 = vector.shape_cast %20 : vector<128x128xf32> to vector<1x128x128xf32>
    tpu.vector_store %arg4[%c0_17, %c384_18, %c0_19], %23 {strides = array<i32>} : memref<1x512x128xf32, #tpu.memory_space<vmem>>, vector<1x128x128xf32>,
    return
  }
  func.func @transform_0(%arg0: i32, %arg1: i32, %arg2: i32) -> (i32, i32, i32) {
    %c0_i32 = arith.constant 0 : i32
    return %arg2, %arg0, %arg1 : i32, i32, i32
  }
  func.func @transform_1(%arg0: i32, %arg1: i32, %arg2: i32) -> (i32, i32, i32) {
    %c0_i32 = arith.constant 0 : i32
    return %arg2, %arg1, %arg0 : i32, i32, i32
  }
}

</mosaic_0001>

<llo_original>
// kernel: tpu_custom_call.1
$region0: #{tpu_custom_call.1}
  #allocation0 [shape = 'u32[]', space=smem, size = 0x4, offset = 0x4, fixed_abs, tag = 'smem constant byte address 0x4 - core index']
  #allocation1 [shape = 'u32[144,128]{1,0:T(1,128)}', space=vmem, size = 0x12000, scoped, tag = 'internal scratch']
  %s0 = inlined_call_operand.hbm [shape: f32[2,384,512], index: 0, kind: input, shape index: {}]
  %s1 = inlined_call_operand.hbm [shape: f32[2,512,384], index: 1, kind: output, shape index: {}]
  %s2 = sld [smem:[#allocation0]]
  $region41: #{tpu_custom_call.1} parent=0
    _
  %s4 = ssub.s32 1, %s2
  %s5 = scalar_select 0, %s4, %s2
  $region1: #{tpu_custom_call.1} parent=0
    #allocation2 [shape = 'u8[524288]{0}', space=vmem, size = 0x80000, scoped, tag = 'input window, operand 0']
    #allocation3 [shape = 's32[2]{0}', space=sflag, size = 0x8, scoped, tag = 'scoped memory for tpu_custom_call.1']
    #allocation4 [shape = 's32[2]{0}', space=sflag, size = 0x8, scoped, tag = 'scoped memory for tpu_custom_call.1']
    #allocation5 [shape = 'u8[524288]{0}', space=vmem, size = 0x80000, scoped, tag = 'output window, operand 0']
    %6 = vsyncpa [#allocation3], 0
    %s7 = scalar_lea.sflag [#allocation3], 1
    %8 = vsyncpa %s7, 0
    %9 = vsyncpa [#allocation4], 0
    %s10 = scalar_lea.sflag [#allocation4], 1
    %11 = vsyncpa %s10, 0
    loop: start=0, step=1, limit=8
    $region2: #{tpu_custom_call.1} parent=1 // loop_pre_header
      _
    $region3: #{tpu_custom_call.1} parent=1 // loop_header
      %s13 = sphi 0, %s17
      %p14 = scmp.ge.s32.totalorder %s13, 8
      %s20 = sphi 0, %s39
      %s21 = sphi 0, %s35
      %s22 = sphi 0, %s31
      %s23 = sphi 0, %s20
      %s24 = sphi 0, %s21
      %s25 = sphi 0, %s22
      %s26 = sphi 0, %s23
      %s27 = sphi 0, %s24
      %s28 = sphi 0, %s25
      %s46 = sphi 0, %s48
      %s49 = sphi 0, %s46
      %s50 = sphi 0, %s49
      %s66 = sphi 0, %s50
      %s76 = sphi 0, %s78
      %s79 = sphi 0, %s76
      %s80 = sphi 0, %s79
      %s96 = sphi 0, %s80
    $region4: #{tpu_custom_call.1} parent=1 // loop_header_branch
      %16 = sbr.rel (%p14) target = $region8
    $region5: #{tpu_custom_call.1} parent=1 // loop_body
      %s18 = ssub.s32 %s13, 1
      %s19 = ssub.s32 %s13, 2
      %s29 = sadd.s32 1, %s22
      %p30 = scmp.ge.s32.totalorder %s29, 2
      %s31 = scalar_select %p30, 0, %s29
      %s32 = sadd.s32 1, %s21
      %s33 = scalar_select %p30, %s32, %s21
      %p34 = scmp.ge.s32.totalorder %s33, 1
      %s35 = scalar_select %p34, 0, %s33
      %s36 = sadd.s32 1, %s20
      %s37 = scalar_select %p34, %s36, %s20
      %p38 = scmp.ge.s32.totalorder %s37, 3
      %s39 = scalar_select %p38, 0, %s37
      %s40 = ssub.s32 %s22, %s31
      %s41 = ssub.s32 %s20, %s39
      %s42 = sor.u32 %s40, %s41
      %s43 = ssub.s32 %s21, %s35
      %s44 = sor.u32 %s42, %s43
      %p45 = scmp.eq.s32.totalorder %s44, 0
      %s47 = sadd.s32 %s46, 1
      %s48 = scalar_select %p45, %s46, %s47
      %p51 = pneg %p45
      %p52 = scmp.eq.s32.totalorder %s13, 5
      %p53 = por %p51, %p52
      %p54 = scmp.ne.s32.totalorder %s46, %s49
      %p55 = scmp.eq.s32.totalorder %s13, 0
      %p56 = por %p54, %p55
      %p57 = scmp.ne.s32.totalorder %s46, %s49
      %p58 = scmp.eq.s32.totalorder %s18, 5
      %p59 = por %p57, %p58
      %p60 = scmp.ne.s32.totalorder %s49, %s50
      %p61 = scmp.eq.s32.totalorder %s18, 0
      %p62 = por %p60, %p61
      %p63 = scmp.ne.s32.totalorder %s49, %s50
      %p64 = scmp.eq.s32.totalorder %s19, 5
      %p65 = por %p63, %p64
      %p67 = scmp.ne.s32.totalorder %s50, %s66
      %p68 = scmp.eq.s32.totalorder %s19, 0
      %p69 = por %p67, %p68
      %s70 = ssub.s32 %s22, %s31
      %s71 = ssub.s32 %s21, %s35
      %s72 = sor.u32 %s70, %s71
      %s73 = ssub.s32 %s20, %s39
      %s74 = sor.u32 %s72, %s73
      %p75 = scmp.eq.s32.totalorder %s74, 0
      %s77 = sadd.s32 %s76, 1
      %s78 = scalar_select %p75, %s76, %s77
      %p81 = pneg %p75
      %p82 = scmp.eq.s32.totalorder %s13, 5
      %p83 = por %p81, %p82
      %p84 = scmp.ne.s32.totalorder %s76, %s79
      %p85 = scmp.eq.s32.totalorder %s13, 0
      %p86 = por %p84, %p85
      %p87 = scmp.ne.s32.totalorder %s76, %s79
      %p88 = scmp.eq.s32.totalorder %s18, 5
      %p89 = por %p87, %p88
      %p90 = scmp.ne.s32.totalorder %s79, %s80
      %p91 = scmp.eq.s32.totalorder %s18, 0
      %p92 = por %p90, %p91
      %p93 = scmp.ne.s32.totalorder %s79, %s80
      %p94 = scmp.eq.s32.totalorder %s19, 5
      %p95 = por %p93, %p94
      %p97 = scmp.ne.s32.totalorder %s80, %s96
      %p98 = scmp.eq.s32.totalorder %s19, 0
      %p99 = por %p97, %p98
      %p100 = scmp.le.s32.totalorder 1, %s13
      %p101 = scmp.lt.s32.totalorder %s13, 7
      %p102 = pnand %p100, %p101
      %p103 = pneg %p102
      // Predicated region
      $region9: #{tpu_custom_call.1} parent=5 // pred_check
        _
      $region10: #{tpu_custom_call.1} parent=5 // pred_check_branch
        %105 = sbr.rel (%p102) target = $region12
      $region11: #{tpu_custom_call.1} parent=5 // pred_region
        %s106 = ssub.s32 %s13, 1
      $region12: #{tpu_custom_call.1} parent=5 // pred_fallthru
        _
      %p107 = scmp.lt.s32.totalorder %s13, 6
      // Predicated region
      $region13: #{tpu_custom_call.1} parent=5 // pred_check
        %p108 = pneg %p107
      $region14: #{tpu_custom_call.1} parent=5 // pred_check_branch
        %110 = sbr.rel (%p108) target = $region16
      $region15: #{tpu_custom_call.1} parent=5 // pred_region
        // Predicated region
        $region17: #{tpu_custom_call.1} parent=15 // pred_check
          %p111 = pneg %p56
        $region18: #{tpu_custom_call.1} parent=15 // pred_check_branch
          %113 = sbr.rel (%p111) target = $region20
        $region19: #{tpu_custom_call.1} parent=15 // pred_region
          %s114 = sand.u32 %s46, 1
          %s115 = scalar_lea.sflag [#allocation3], %s114
          %s116 = sand.u32 %s46, 1
          %s117 = smul.addr %s116, 512
          %s118 = scalar_lea.vmem [#allocation2], %s117
          %s119 = smul.u32 16, %s20
          %s120 = smul.u32 4, %s21
          %s122 = ssub.s32 8192, 8192
          %123 = vsyncadd %s115, %s122
          %s124 = smul.addr %s119, 4
          %s125 = sadd.s32 %s120, %s124
          %s126 = smul.addr %s22, 192
          %s127 = sadd.s32 %s125, %s126
          %s128 = smul.addr %s127, 128
          %s129 = scalar_lea.hbm %s0, %s128
          %s130 = sshll.u32 %s118, 4
          %s131 = int_to_ptr.vmem [resolvable:$true] %s130
          %136 = dma.hbm_to_vmem [thread:$0]  %s129, 8192, %s131, %s115, 512, 512, 32
        $region20: #{tpu_custom_call.1} parent=15 // pred_fallthru
          _
      $region16: #{tpu_custom_call.1} parent=5 // pred_fallthru
        _
      %p137 = scmp.le.s32.totalorder 1, %s13
      %p138 = scmp.lt.s32.totalorder %s13, 7
      %p139 = pnand %p137, %p138
      %p140 = pneg %p139
      // Predicated region
      $region21: #{tpu_custom_call.1} parent=5 // pred_check
        _
      $region22: #{tpu_custom_call.1} parent=5 // pred_check_branch
        %142 = sbr.rel (%p139) target = $region24
      $region23: #{tpu_custom_call.1} parent=5 // pred_region
        %s143 = ssub.s32 %s13, 1
        %s144 = sand.u32 %s49, 1
        %s145 = scalar_lea.sflag [#allocation3], %s144
        %s146 = sand.u32 %s49, 1
        %s147 = smul.addr %s146, 512
        %s148 = scalar_lea.vmem [#allocation2], %s147
        // Predicated region
        $region25: #{tpu_custom_call.1} parent=23 // pred_check
          %p149 = pneg %p62
        $region26: #{tpu_custom_call.1} parent=23 // pred_check_branch
          %151 = sbr.rel (%p149) target = $region28
        $region27: #{tpu_custom_call.1} parent=23 // pred_region
          %152 = dma.done %s145, 8192
        $region28: #{tpu_custom_call.1} parent=23 // pred_fallthru
          _
        %s153 = sand.u32 %s49, 1
        %s154 = scalar_lea.sflag [#allocation3], %s153
        %s155 = sand.u32 %s49, 1
        %s156 = smul.addr %s155, 512
        %s157 = scalar_lea.vmem [#allocation2], %s156
        %p158 = pneg %p62
        %p159 = pneg %p59
        %p160 = pneg %p92
        %p161 = pneg %p89
        %s162 = sand.u32 %s79, 1
        %s163 = scalar_lea.sflag [#allocation4], %s162
        %s164 = sand.u32 %s79, 1
        %s165 = smul.addr %s164, 512
        %s166 = scalar_lea.vmem [#allocation5], %s165
        %s167 = smul.u32 16, %s23
        %s168 = smul.u32 4, %s24
        %s169 = smul.u32 64, %s24
        %v170 = vld [vmem:[%s148] sm:$0xff]
        %v171 = vld [vmem:[%s148 + $0x20] sm:$0xff]
        %v172 = vld [vmem:[%s148 + $0x40] sm:$0xff]
        %v173 = vld [vmem:[%s148 + $0x60] sm:$0xff]
        %v174 = vld [vmem:[%s148 + $0x80] sm:$0xff]
        %v175 = vld [vmem:[%s148 + $0xa0] sm:$0xff]
        %v176 = vld [vmem:[%s148 + $0xc0] sm:$0xff]
        %v177 = vld [vmem:[%s148 + $0xe0] sm:$0xff]
        %v178 = vld [vmem:[%s148 + $0x100] sm:$0xff]
        %v179 = vld [vmem:[%s148 + $0x120] sm:$0xff]
        %v180 = vld [vmem:[%s148 + $0x140] sm:$0xff]
        %v181 = vld [vmem:[%s148 + $0x160] sm:$0xff]
        %v182 = vld [vmem:[%s148 + $0x180] sm:$0xff]
        %v183 = vld [vmem:[%s148 + $0x1a0] sm:$0xff]
        %v184 = vld [vmem:[%s148 + $0x1c0] sm:$0xff]
        %v185 = vld [vmem:[%s148 + $0x1e0] sm:$0xff]
        %186 = vxpose.xlu0.b32.start [1/16] %v170, 128
        %187 = vxpose.xlu0.b32.cont [2/16] %v171, 128
        %188 = vxpose.xlu0.b32.cont [3/16] %v172, 128
        %189 = vxpose.xlu0.b32.cont [4/16] %v173, 128
        %190 = vxpose.xlu0.b32.cont [5/16] %v174, 128
        %191 = vxpose.xlu0.b32.cont [6/16] %v175, 128
        %192 = vxpose.xlu0.b32.cont [7/16] %v176, 128
        %193 = vxpose.xlu0.b32.cont [8/16] %v177, 128
        %194 = vxpose.xlu0.b32.cont [9/16] %v178, 128
        %195 = vxpose.xlu0.b32.cont [10/16] %v179, 128
        %196 = vxpose.xlu0.b32.cont [11/16] %v180, 128
        %197 = vxpose.xlu0.b32.cont [12/16] %v181, 128
        %198 = vxpose.xlu0.b32.cont [13/16] %v182, 128
        %199 = vxpose.xlu0.b32.cont [14/16] %v183, 128
        %200 = vxpose.xlu0.b32.cont [15/16] %v184, 128
        %201 = vxpose.xlu0.b32.end [16/16] %v185, 128
        %v202 = vpop.trf.xlu0
        %v203 = vpop.trf.xlu0
        %v204 = vpop.trf.xlu0
        %v205 = vpop.trf.xlu0
        %v206 = vpop.trf.xlu0
        %v207 = vpop.trf.xlu0
        %v208 = vpop.trf.xlu0
        %v209 = vpop.trf.xlu0
        %v210 = vpop.trf.xlu0
        %v211 = vpop.trf.xlu0
        %v212 = vpop.trf.xlu0
        %v213 = vpop.trf.xlu0
        %v214 = vpop.trf.xlu0
        %v215 = vpop.trf.xlu0
        %v216 = vpop.trf.xlu0
        %v217 = vpop.trf.xlu0
        %218 = vst [vmem:[%s166] sm:$0xff] %v202
        %219 = vst [vmem:[%s166 + $0x8] sm:$0xff] %v203
        %220 = vst [vmem:[%s166 + $0x10] sm:$0xff] %v204
        %221 = vst [vmem:[%s166 + $0x18] sm:$0xff] %v205
        %222 = vst [vmem:[%s166 + $0x20] sm:$0xff] %v206
        %223 = vst [vmem:[%s166 + $0x28] sm:$0xff] %v207
        %224 = vst [vmem:[%s166 + $0x30] sm:$0xff] %v208
        %225 = vst [vmem:[%s166 + $0x38] sm:$0xff] %v209
        %226 = vst [vmem:[%s166 + $0x40] sm:$0xff] %v210
        %227 = vst [vmem:[%s166 + $0x48] sm:$0xff] %v211
        %228 = vst [vmem:[%s166 + $0x50] sm:$0xff] %v212
        %229 = vst [vmem:[%s166 + $0x58] sm:$0xff] %v213
        %230 = vst [vmem:[%s166 + $0x60] sm:$0xff] %v214
        %231 = vst [vmem:[%s166 + $0x68] sm:$0xff] %v215
        %232 = vst [vmem:[%s166 + $0x70] sm:$0xff] %v216
        %233 = vst [vmem:[%s166 + $0x78] sm:$0xff] %v217
        %v234 = vld [vmem:[%s148 + $0x8] sm:$0xff]
        %v235 = vld [vmem:[%s148 + $0x28] sm:$0xff]
        %v236 = vld [vmem:[%s148 + $0x48] sm:$0xff]
        %v237 = vld [vmem:[%s148 + $0x68] sm:$0xff]
        %v238 = vld [vmem:[%s148 + $0x88] sm:$0xff]
        %v239 = vld [vmem:[%s148 + $0xa8] sm:$0xff]
        %v240 = vld [vmem:[%s148 + $0xc8] sm:$0xff]
        %v241 = vld [vmem:[%s148 + $0xe8] sm:$0xff]
        %v242 = vld [vmem:[%s148 + $0x108] sm:$0xff]
        %v243 = vld [vmem:[%s148 + $0x128] sm:$0xff]
        %v244 = vld [vmem:[%s148 + $0x148] sm:$0xff]
        %v245 = vld [vmem:[%s148 + $0x168] sm:$0xff]
        %v246 = vld [vmem:[%s148 + $0x188] sm:$0xff]
        %v247 = vld [vmem:[%s148 + $0x1a8] sm:$0xff]
        %v248 = vld [vmem:[%s148 + $0x1c8] sm:$0xff]
        %v249 = vld [vmem:[%s148 + $0x1e8] sm:$0xff]
        %250 = vxpose.xlu0.b32.start [1/16] %v234, 128
        %251 = vxpose.xlu0.b32.cont [2/16] %v235, 128
        %252 = vxpose.xlu0.b32.cont [3/16] %v236, 128
        %253 = vxpose.xlu0.b32.cont [4/16] %v237, 128
        %254 = vxpose.xlu0.b32.cont [5/16] %v238, 128
        %255 = vxpose.xlu0.b32.cont [6/16] %v239, 128
        %256 = vxpose.xlu0.b32.cont [7/16] %v240, 128
        %257 = vxpose.xlu0.b32.cont [8/16] %v241, 128
        %258 = vxpose.xlu0.b32.cont [9/16] %v242, 128
        %259 = vxpose.xlu0.b32.cont [10/16] %v243, 128
        %260 = vxpose.xlu0.b32.cont [11/16] %v244, 128
        %261 = vxpose.xlu0.b32.cont [12/16] %v245, 128
        %262 = vxpose.xlu0.b32.cont [13/16] %v246, 128
        %263 = vxpose.xlu0.b32.cont [14/16] %v247, 128
        %264 = vxpose.xlu0.b32.cont [15/16] %v248, 128
        %265 = vxpose.xlu0.b32.end [16/16] %v249, 128
        %v266 = vpop.trf.xlu0
        %v267 = vpop.trf.xlu0
        %v268 = vpop.trf.xlu0
        %v269 = vpop.trf.xlu0
        %v270 = vpop.trf.xlu0
        %v271 = vpop.trf.xlu0
        %v272 = vpop.trf.xlu0
        %v273 = vpop.trf.xlu0
        %v274 = vpop.trf.xlu0
        %v275 = vpop.trf.xlu0
        %v276 = vpop.trf.xlu0
        %v277 = vpop.trf.xlu0
        %v278 = vpop.trf.xlu0
        %v279 = vpop.trf.xlu0
        %v280 = vpop.trf.xlu0
        %v281 = vpop.trf.xlu0
        %282 = vst [vmem:[%s166 + $0x80] sm:$0xff] %v266
        %283 = vst [vmem:[%s166 + $0x88] sm:$0xff] %v267
        %284 = vst [vmem:[%s166 + $0x90] sm:$0xff] %v268
        %285 = vst [vmem:[%s166 + $0x98] sm:$0xff] %v269
        %286 = vst [vmem:[%s166 + $0xa0] sm:$0xff] %v270
        %287 = vst [vmem:[%s166 + $0xa8] sm:$0xff] %v271
        %288 = vst [vmem:[%s166 + $0xb0] sm:$0xff] %v272
        %289 = vst [vmem:[%s166 + $0xb8] sm:$0xff] %v273
        %290 = vst [vmem:[%s166 + $0xc0] sm:$0xff] %v274
        %291 = vst [vmem:[%s166 + $0xc8] sm:$0xff] %v275
        %292 = vst [vmem:[%s166 + $0xd0] sm:$0xff] %v276
        %293 = vst [vmem:[%s166 + $0xd8] sm:$0xff] %v277
        %294 = vst [vmem:[%s166 + $0xe0] sm:$0xff] %v278
        %295 = vst [vmem:[%s166 + $0xe8] sm:$0xff] %v279
        %296 = vst [vmem:[%s166 + $0xf0] sm:$0xff] %v280
        %297 = vst [vmem:[%s166 + $0xf8] sm:$0xff] %v281
        %v298 = vld [vmem:[%s148 + $0x10] sm:$0xff]
        %v299 = vld [vmem:[%s148 + $0x30] sm:$0xff]
        %v300 = vld [vmem:[%s148 + $0x50] sm:$0xff]
        %v301 = vld [vmem:[%s148 + $0x70] sm:$0xff]
        %v302 = vld [vmem:[%s148 + $0x90] sm:$0xff]
        %v303 = vld [vmem:[%s148 + $0xb0] sm:$0xff]
        %v304 = vld [vmem:[%s148 + $0xd0] sm:$0xff]
        %v305 = vld [vmem:[%s148 + $0xf0] sm:$0xff]
        %v306 = vld [vmem:[%s148 + $0x110] sm:$0xff]
        %v307 = vld [vmem:[%s148 + $0x130] sm:$0xff]
        %v308 = vld [vmem:[%s148 + $0x150] sm:$0xff]
        %v309 = vld [vmem:[%s148 + $0x170] sm:$0xff]
        %v310 = vld [vmem:[%s148 + $0x190] sm:$0xff]
        %v311 = vld [vmem:[%s148 + $0x1b0] sm:$0xff]
        %v312 = vld [vmem:[%s148 + $0x1d0] sm:$0xff]
        %v313 = vld [vmem:[%s148 + $0x1f0] sm:$0xff]
        %314 = vxpose.xlu0.b32.start [1/16] %v298, 128
        %315 = vxpose.xlu0.b32.cont [2/16] %v299, 128
        %316 = vxpose.xlu0.b32.cont [3/16] %v300, 128
        %317 = vxpose.xlu0.b32.cont [4/16] %v301, 128
        %318 = vxpose.xlu0.b32.cont [5/16] %v302, 128
        %319 = vxpose.xlu0.b32.cont [6/16] %v303, 128
        %320 = vxpose.xlu0.b32.cont [7/16] %v304, 128
        %321 = vxpose.xlu0.b32.cont [8/16] %v305, 128
        %322 = vxpose.xlu0.b32.cont [9/16] %v306, 128
        %323 = vxpose.xlu0.b32.cont [10/16] %v307, 128
        %324 = vxpose.xlu0.b32.cont [11/16] %v308, 128
        %325 = vxpose.xlu0.b32.cont [12/16] %v309, 128
        %326 = vxpose.xlu0.b32.cont [13/16] %v310, 128
        %327 = vxpose.xlu0.b32.cont [14/16] %v311, 128
        %328 = vxpose.xlu0.b32.cont [15/16] %v312, 128
        %329 = vxpose.xlu0.b32.end [16/16] %v313, 128
        %v330 = vpop.trf.xlu0
        %v331 = vpop.trf.xlu0
        %v332 = vpop.trf.xlu0
        %v333 = vpop.trf.xlu0
        %v334 = vpop.trf.xlu0
        %v335 = vpop.trf.xlu0
        %v336 = vpop.trf.xlu0
        %v337 = vpop.trf.xlu0
        %v338 = vpop.trf.xlu0
        %v339 = vpop.trf.xlu0
        %v340 = vpop.trf.xlu0
        %v341 = vpop.trf.xlu0
        %v342 = vpop.trf.xlu0
        %v343 = vpop.trf.xlu0
        %v344 = vpop.trf.xlu0
        %v345 = vpop.trf.xlu0
        %346 = vst [vmem:[%s166 + $0x100] sm:$0xff] %v330
        %347 = vst [vmem:[%s166 + $0x108] sm:$0xff] %v331
        %348 = vst [vmem:[%s166 + $0x110] sm:$0xff] %v332
        %349 = vst [vmem:[%s166 + $0x118] sm:$0xff] %v333
        %350 = vst [vmem:[%s166 + $0x120] sm:$0xff] %v334
        %351 = vst [vmem:[%s166 + $0x128] sm:$0xff] %v335
        %352 = vst [vmem:[%s166 + $0x130] sm:$0xff] %v336
        %353 = vst [vmem:[%s166 + $0x138] sm:$0xff] %v337
        %354 = vst [vmem:[%s166 + $0x140] sm:$0xff] %v338
        %355 = vst [vmem:[%s166 + $0x148] sm:$0xff] %v339
        %356 = vst [vmem:[%s166 + $0x150] sm:$0xff] %v340
        %357 = vst [vmem:[%s166 + $0x158] sm:$0xff] %v341
        %358 = vst [vmem:[%s166 + $0x160] sm:$0xff] %v342
        %359 = vst [vmem:[%s166 + $0x168] sm:$0xff] %v343
        %360 = vst [vmem:[%s166 + $0x170] sm:$0xff] %v344
        %361 = vst [vmem:[%s166 + $0x178] sm:$0xff] %v345
        %v362 = vld [vmem:[%s148 + $0x18] sm:$0xff]
        %v363 = vld [vmem:[%s148 + $0x38] sm:$0xff]
        %v364 = vld [vmem:[%s148 + $0x58] sm:$0xff]
        %v365 = vld [vmem:[%s148 + $0x78] sm:$0xff]
        %v366 = vld [vmem:[%s148 + $0x98] sm:$0xff]
        %v367 = vld [vmem:[%s148 + $0xb8] sm:$0xff]
        %v368 = vld [vmem:[%s148 + $0xd8] sm:$0xff]
        %v369 = vld [vmem:[%s148 + $0xf8] sm:$0xff]
        %v370 = vld [vmem:[%s148 + $0x118] sm:$0xff]
        %v371 = vld [vmem:[%s148 + $0x138] sm:$0xff]
        %v372 = vld [vmem:[%s148 + $0x158] sm:$0xff]
        %v373 = vld [vmem:[%s148 + $0x178] sm:$0xff]
        %v374 = vld [vmem:[%s148 + $0x198] sm:$0xff]
        %v375 = vld [vmem:[%s148 + $0x1b8] sm:$0xff]
        %v376 = vld [vmem:[%s148 + $0x1d8] sm:$0xff]
        %v377 = vld [vmem:[%s148 + $0x1f8] sm:$0xff]
        %378 = vxpose.xlu0.b32.start [1/16] %v362, 128
        %379 = vxpose.xlu0.b32.cont [2/16] %v363, 128
        %380 = vxpose.xlu0.b32.cont [3/16] %v364, 128
        %381 = vxpose.xlu0.b32.cont [4/16] %v365, 128
        %382 = vxpose.xlu0.b32.cont [5/16] %v366, 128
        %383 = vxpose.xlu0.b32.cont [6/16] %v367, 128
        %384 = vxpose.xlu0.b32.cont [7/16] %v368, 128
        %385 = vxpose.xlu0.b32.cont [8/16] %v369, 128
        %386 = vxpose.xlu0.b32.cont [9/16] %v370, 128
        %387 = vxpose.xlu0.b32.cont [10/16] %v371, 128
        %388 = vxpose.xlu0.b32.cont [11/16] %v372, 128
        %389 = vxpose.xlu0.b32.cont [12/16] %v373, 128
        %390 = vxpose.xlu0.b32.cont [13/16] %v374, 128
        %391 = vxpose.xlu0.b32.cont [14/16] %v375, 128
        %392 = vxpose.xlu0.b32.cont [15/16] %v376, 128
        %393 = vxpose.xlu0.b32.end [16/16] %v377, 128
        %v394 = vpop.trf.xlu0
        %v395 = vpop.trf.xlu0
        %v396 = vpop.trf.xlu0
        %v397 = vpop.trf.xlu0
        %v398 = vpop.trf.xlu0
        %v399 = vpop.trf.xlu0
        %v400 = vpop.trf.xlu0
        %v401 = vpop.trf.xlu0
        %v402 = vpop.trf.xlu0
        %v403 = vpop.trf.xlu0
        %v404 = vpop.trf.xlu0
        %v405 = vpop.trf.xlu0
        %v406 = vpop.trf.xlu0
        %v407 = vpop.trf.xlu0
        %v408 = vpop.trf.xlu0
        %v409 = vpop.trf.xlu0
        %410 = vst [vmem:[%s166 + $0x180] sm:$0xff] %v394
        %411 = vst [vmem:[%s166 + $0x188] sm:$0xff] %v395
        %412 = vst [vmem:[%s166 + $0x190] sm:$0xff] %v396
        %413 = vst [vmem:[%s166 + $0x198] sm:$0xff] %v397
        %414 = vst [vmem:[%s166 + $0x1a0] sm:$0xff] %v398
        %415 = vst [vmem:[%s166 + $0x1a8] sm:$0xff] %v399
        %416 = vst [vmem:[%s166 + $0x1b0] sm:$0xff] %v400
        %417 = vst [vmem:[%s166 + $0x1b8] sm:$0xff] %v401
        %418 = vst [vmem:[%s166 + $0x1c0] sm:$0xff] %v402
        %419 = vst [vmem:[%s166 + $0x1c8] sm:$0xff] %v403
        %420 = vst [vmem:[%s166 + $0x1d0] sm:$0xff] %v404
        %421 = vst [vmem:[%s166 + $0x1d8] sm:$0xff] %v405
        %422 = vst [vmem:[%s166 + $0x1e0] sm:$0xff] %v406
        %423 = vst [vmem:[%s166 + $0x1e8] sm:$0xff] %v407
        %424 = vst [vmem:[%s166 + $0x1f0] sm:$0xff] %v408
        %425 = vst [vmem:[%s166 + $0x1f8] sm:$0xff] %v409
        %s426 = sand.u32 %s79, 1
        %s427 = scalar_lea.sflag [#allocation4], %s426
        %s428 = sand.u32 %s79, 1
        %s429 = smul.addr %s428, 512
        %s430 = scalar_lea.vmem [#allocation5], %s429
        // Predicated region
        $region29: #{tpu_custom_call.1} parent=23 // pred_check
          %p431 = pneg %p89
        $region30: #{tpu_custom_call.1} parent=23 // pred_check_branch
          %433 = sbr.rel (%p431) target = $region32
        $region31: #{tpu_custom_call.1} parent=23 // pred_region
          %s434 = smul.u32 64, %s24
          %s436 = ssub.s32 8192, 8192
          %437 = vsyncadd %s427, %s436
          %s438 = smul.addr %s434, 3
          %s439 = sadd.s32 %s23, %s438
          %s440 = smul.addr %s25, 192
          %s441 = sadd.s32 %s439, %s440
          %s442 = smul.addr %s441, 128
          %s443 = scalar_lea.hbm %s1, %s442
          %s444 = sshll.u32 %s430, 4
          %s445 = int_to_ptr.vmem [resolvable:$true] %s444
          %450 = dma.vmem_to_hbm [thread:$0]  %s445, 8192, %s443, %s427, 128, 384, 8
        $region32: #{tpu_custom_call.1} parent=23 // pred_fallthru
          _
      $region24: #{tpu_custom_call.1} parent=5 // pred_fallthru
        _
      %p451 = scmp.le.s32.totalorder 2, %s13
      // Predicated region
      $region33: #{tpu_custom_call.1} parent=5 // pred_check
        %p452 = pneg %p451
      $region34: #{tpu_custom_call.1} parent=5 // pred_check_branch
        %454 = sbr.rel (%p452) target = $region36
      $region35: #{tpu_custom_call.1} parent=5 // pred_region
        %s455 = ssub.s32 %s13, 2
        // Predicated region
        $region37: #{tpu_custom_call.1} parent=35 // pred_check
          %p456 = pneg %p95
        $region38: #{tpu_custom_call.1} parent=35 // pred_check_branch
          %458 = sbr.rel (%p456) target = $region40
        $region39: #{tpu_custom_call.1} parent=35 // pred_region
          %s459 = sand.u32 %s80, 1
          %s460 = scalar_lea.sflag [#allocation4], %s459
          %s461 = sand.u32 %s80, 1
          %s462 = smul.addr %s461, 512
          %s463 = scalar_lea.vmem [#allocation5], %s462
          %464 = dma.done %s460, 8192
        $region40: #{tpu_custom_call.1} parent=35 // pred_fallthru
          _
      $region36: #{tpu_custom_call.1} parent=5 // pred_fallthru
        _
    $region6: #{tpu_custom_call.1} parent=1 // loop_footer
      %s17 = sadd.s32 1, %s13
    $region7: #{tpu_custom_call.1} parent=1 // loop_footer_branch
      %12 = sbr.rel target = $region3
    $region8: #{tpu_custom_call.1} parent=1 // loop_exit
      _
    %465 = vsyncpa [#allocation3], 1
    %s466 = scalar_lea.sflag [#allocation3], 1
    %467 = vsyncpa %s466, 1
    %468 = vsyncpa [#allocation4], 1
    %s469 = scalar_lea.sflag [#allocation4], 1
    %470 = vsyncpa %s469, 1

</llo_original>
